<compile_context>
chip_gen: v7x
topology: tpu7x:2x2x1
jax: 0.10.0
libtpu: 0.0.40
codegen_flags: <defaults>
</compile_context>

<pallas_src>
import functools

import jax
import jax.numpy as jnp
from jax import lax
from jax.experimental import pallas as pl
from jax.experimental.pallas import tpu as pltpu

LN_EPS = 1e-5  # nn.LayerNorm default


def _film_kernel(gb_ref, x_ref, o_ref, *, d_model):
    # gb_ref: (2, D)  -- row 0 = gamma(t), row 1 = beta(t) for this batch
    # x_ref/o_ref: (TS, D) sequence tile (batch dim squeezed away)
    x = x_ref[...].astype(jnp.float32)                                  # (TS, D)

    # Single-pass LayerNorm moments over the last dim (elementwise_affine=False):
    # one full-tile f32 temporary (the upcast x) stays live across both sums.
    inv_d = 1.0 / float(d_model)
    mean = jnp.sum(x, axis=-1, keepdims=True) * inv_d                   # (TS, 1)
    ex2 = jnp.sum(x * x, axis=-1, keepdims=True) * inv_d                # (TS, 1)
    var = jnp.maximum(ex2 - mean * mean, 0.0)                           # (TS, 1)
    rstd = lax.rsqrt(var + LN_EPS)                                      # (TS, 1)

    # g * norm(x) + b, g/b broadcast over the sequence axis
    # (the .unsqueeze(1) in the PyTorch forward).
    g = gb_ref[0:1, :].astype(jnp.float32)                              # (1, D)
    b = gb_ref[1:2, :].astype(jnp.float32)                              # (1, D)
    o_ref[...] = ((x - mean) * (rstd * g) + b).astype(o_ref.dtype)


def _vmem_limit_bytes():
    """Generation-aware scoped-VMEM budget with compiler headroom."""
    cap = 64 * 1024 * 1024                     # conservative default (v7x per-TC)
    try:
        info = pltpu.get_tpu_info()
        cap = int(getattr(info, "vmem_capacity_bytes", cap) or cap)
    except Exception:
        pass
    # v7x (64 MiB physical) -> 48 MiB scoped; v5e/v6e (128 MiB) -> 64 MiB.
    return min(max(cap - 16 * 1024 * 1024, 32 * 1024 * 1024), 64 * 1024 * 1024)


def _choose_seq_tile(B, S, D, itemsize, vmem_limit):
    # Native sublane packing: f32 -> 8 rows, bf16 -> 16, int8/fp8 -> 32.
    align = max(8, 32 // itemsize)
    if S <= align:
        return S                               # full-dim block (layout exception)

    # Per-row VMEM footprint: double-buffered x + out tiles in the activation
    # dtype, plus ~3 live f32 full-tile temporaries in the LN body.
    bytes_per_row = D * (4 * itemsize + 3 * 4)
    ts = (int(vmem_limit) * 3 // 4) // max(1, bytes_per_row)
    # Beyond ~8 MiB per x-tile the ~0.35 us/step overhead is already <1%.
    ts = min(ts, (8 * 1024 * 1024) // max(1, D * itemsize))
    ts = min(ts, S)
    ts = max(align, (ts // align) * align)

    # Keep enough grid steps for DMA pipelining and v7x's two TensorCores.
    min_steps = 8
    while B * (-(-S // ts)) < min_steps and ts > align:
        ts = max(align, ((ts // 2) // align) * align)
    return ts


def film_forward(x, t, wg, bg, wb, bb):
    """x: (B, S, D), t: (B, Dt), wg/wb: (Dt, D), bg/bb: (D,) -> (B, S, D)."""
    B, S, D = x.shape
    itemsize = jnp.dtype(x.dtype).itemsize

    # FiLM parameters hoisted to XLA (one batched matmul each), kept in f32 so
    # they are not pre-rounded to the activation dtype; bandwidth cost is only
    # 2*B*D floats. Packed into one (B, 2, D) array -> single small DMA/batch.
    g = jnp.dot(t, wg, preferred_element_type=jnp.float32) + bg.astype(jnp.float32)
    b = jnp.dot(t, wb, preferred_element_type=jnp.float32) + bb.astype(jnp.float32)
    gb = jnp.stack([g, b], axis=1)                                     # (B, 2, D)

    vmem_limit = _vmem_limit_bytes()
    TS = _choose_seq_tile(B, S, D, itemsize, vmem_limit)
    grid = (B, pl.cdiv(S, TS))

    cost = pl.CostEstimate(
        flops=8 * B * S * D,                                   # LN + affine
        transcendentals=B * S,                                 # rsqrt per row
        bytes_accessed=2 * B * S * D * itemsize + 2 * B * D * 4,
    )

    kernel = functools.partial(_film_kernel, d_model=D)

    return pl.pallas_call(
        kernel,
        out_shape=jax.ShapeDtypeStruct((B, S, D), x.dtype),
        grid_spec=pltpu.PrefetchScalarGridSpec(
            num_scalar_prefetch=0,
            grid=grid,
            in_specs=[
                pl.BlockSpec((pl.Squeezed(), 2, D),
                             lambda bi, si: (bi, 0, 0)),               # gb
                pl.BlockSpec((pl.Squeezed(), TS, D),
                             lambda bi, si: (bi, si, 0)),              # x
            ],
            out_specs=pl.BlockSpec((pl.Squeezed(), TS, D),
                                   lambda bi, si: (bi, si, 0)),
        ),
        compiler_params=pltpu.CompilerParams(
            dimension_semantics=("parallel", "parallel"),
            vmem_limit_bytes=vmem_limit,
        ),
        cost_estimate=cost,
    )(gb, x)


def film_reference(x, t, wg, bg, wb, bb):
    g = (t @ wg + bg)[:, None, :]
    b = (t @ wb + bb)[:, None, :]
    mean = jnp.mean(x, axis=-1, keepdims=True)
    var = jnp.mean((x - mean) ** 2, axis=-1, keepdims=True)
    xn = (x - mean) / jnp.sqrt(var + LN_EPS)
    return g * xn + b


if __name__ == "__main__":
    B, S, D, Dt = 2, 8, 128, 32   # D multiple of 128 -> lane-dense stores

    key = jax.random.PRNGKey(0)
    kx, kt, kwg, kbg, kwb, kbb = jax.random.split(key, 6)

    x = jax.random.normal(kx, (B, S, D), dtype=jnp.float32)
    t = jax.random.normal(kt, (B, Dt), dtype=jnp.float32)

    # Deterministic synthetic parameters (shapes from nn.Linear(d_t, d_model)).
    # Stored as (Dt, D) = transpose of PyTorch's (d_model, d_t) weight layout.
    bound = 1.0 / (Dt ** 0.5)
    wg = jax.random.uniform(kwg, (Dt, D), jnp.float32, -bound, bound)
    bg = jax.random.uniform(kbg, (D,), jnp.float32, -bound, bound)
    wb = jax.random.uniform(kwb, (Dt, D), jnp.float32, -bound, bound)
    bb = jax.random.uniform(kbb, (D,), jnp.float32, -bound, bound)

    out = film_forward(x, t, wg, bg, wb, bb)
    jax.block_until_ready(out)

    ref = film_reference(x, t, wg, bg, wb, bb)
    assert out.shape == (B, S, D)
    assert jnp.allclose(out, ref, atol=1e-5, rtol=1e-5), "mismatch vs reference"

    print("KERNEL_OK")
</pallas_src>

<mosaic_0001>
module attributes {stable_mosaic.version = 11 : i64} {
  func.func @_film_kernel(%arg0: i32, %arg1: i32, %arg2: memref<1x2x128xf32, #tpu.memory_space<vmem>>, %arg3: memref<1x8x128xf32, #tpu.memory_space<vmem>>, %arg4: memref<1x8x128xf32, #tpu.memory_space<vmem>>) attributes {dimension_semantics = [#tpu.dimension_semantics<parallel>, #tpu.dimension_semantics<parallel>], iteration_bounds = array<i64: 2, 1>, scalar_prefetch = 0 : i64, scratch_operands = 0 : i64, tpu.core_type = #tpu.core_type<tc>, window_params = [{transform_indices = @transform_0, window_bounds = array<i64: 1, 2, 128>}, {transform_indices = @transform_1, window_bounds = array<i64: 1, 8, 128>}, {transform_indices = @transform_2, window_bounds = array<i64: 1, 8, 128>}]} {
    %c0 = arith.constant 0 : index
    %c0_0 = arith.constant 0 : index
    %c0_1 = arith.constant 0 : index
    %0 = vector.load %arg3[%c0, %c0_0, %c0_1] : memref<1x8x128xf32, #tpu.memory_space<vmem>>, vector<1x8x128xf32>
    %1 = vector.shape_cast %0 : vector<1x8x128xf32> to vector<8x128xf32>
    %cst = arith.constant dense<0.000000e+00> : vector<8xf32>
    %2 = vector.multi_reduction <add>, %1, %cst [1] : vector<8x128xf32> to vector<8xf32>
    %3 = vector.shape_cast %2 : vector<8xf32> to vector<8x1xf32>
    %cst_2 = arith.constant 7.812500e-03 : f32
    %4 = vector.broadcast %cst_2 : f32 to vector<8x1xf32>
    %5 = arith.mulf %3, %4 : vector<8x1xf32>
    %6 = arith.mulf %1, %1 : vector<8x128xf32>
    %cst_3 = arith.constant dense<0.000000e+00> : vector<8xf32>
    %7 = vector.multi_reduction <add>, %6, %cst_3 [1] : vector<8x128xf32> to vector<8xf32>
    %8 = vector.shape_cast %7 : vector<8xf32> to vector<8x1xf32>
    %cst_4 = arith.constant 7.812500e-03 : f32
    %9 = vector.broadcast %cst_4 : f32 to vector<8x1xf32>
    %10 = arith.mulf %8, %9 : vector<8x1xf32>
    %11 = arith.mulf %5, %5 : vector<8x1xf32>
    %12 = arith.subf %10, %11 : vector<8x1xf32>
    %cst_5 = arith.constant 0.000000e+00 : f32
    %13 = vector.broadcast %cst_5 : f32 to vector<8x1xf32>
    %14 = arith.maximumf %12, %13 : vector<8x1xf32>
    %cst_6 = arith.constant 9.99999974E-6 : f32
    %15 = vector.broadcast %cst_6 : f32 to vector<8x1xf32>
    %16 = arith.addf %14, %15 : vector<8x1xf32>
    %17 = math.rsqrt %16 : vector<8x1xf32>
    %c0_7 = arith.constant 0 : index
    %c0_8 = arith.constant 0 : index
    %c0_9 = arith.constant 0 : index
    %18 = vector.load %arg2[%c0_7, %c0_8, %c0_9] : memref<1x2x128xf32, #tpu.memory_space<vmem>>, vector<1x1x128xf32>
    %19 = vector.shape_cast %18 : vector<1x1x128xf32> to vector<1x128xf32>
    %c0_10 = arith.constant 0 : index
    %c1 = arith.constant 1 : index
    %c0_11 = arith.constant 0 : index
    %20 = vector.load %arg2[%c0_10, %c1, %c0_11] : memref<1x2x128xf32, #tpu.memory_space<vmem>>, vector<1x1x128xf32>
    %21 = vector.shape_cast %20 : vector<1x1x128xf32> to vector<1x128xf32>
    %22 = vector.broadcast %5 : vector<8x1xf32> to vector<8x128xf32>
    %23 = arith.subf %1, %22 : vector<8x128xf32>
    %24 = vector.broadcast %17 : vector<8x1xf32> to vector<8x128xf32>
    %25 = vector.broadcast %19 : vector<1x128xf32> to vector<8x128xf32>
    %26 = arith.mulf %24, %25 : vector<8x128xf32>
    %27 = arith.mulf %23, %26 : vector<8x128xf32>
    %28 = vector.broadcast %21 : vector<1x128xf32> to vector<8x128xf32>
    %29 = arith.addf %27, %28 : vector<8x128xf32>
    %c0_12 = arith.constant 0 : index
    %c0_13 = arith.constant 0 : index
    %c0_14 = arith.constant 0 : index
    %30 = vector.load %arg4[%c0_12, %c0_13, %c0_14] : memref<1x8x128xf32, #tpu.memory_space<vmem>>, vector<1x8x128xf32>
    %31 = vector.shape_cast %30 : vector<1x8x128xf32> to vector<8x128xf32>
    %32 = vector.shape_cast %29 : vector<8x128xf32> to vector<1x8x128xf32>
    tpu.vector_store %arg4[%c0_12, %c0_13, %c0_14], %32 {strides = array<i32>} : memref<1x8x128xf32, #tpu.memory_space<vmem>>, vector<1x8x128xf32>,
    return
  }
  func.func @transform_0(%arg0: i32, %arg1: i32) -> (i32, i32, i32) {
    %c0_i32 = arith.constant 0 : i32
    %c0_i32_0 = arith.constant 0 : i32
    %c0_i32_1 = arith.constant 0 : i32
    return %arg0, %c0_i32, %c0_i32_0 : i32, i32, i32
  }
  func.func @transform_1(%arg0: i32, %arg1: i32) -> (i32, i32, i32) {
    %c0_i32 = arith.constant 0 : i32
    %c0_i32_0 = arith.constant 0 : i32
    return %arg0, %arg1, %c0_i32 : i32, i32, i32
  }
  func.func @transform_2(%arg0: i32, %arg1: i32) -> (i32, i32, i32) {
    %c0_i32 = arith.constant 0 : i32
    %c0_i32_0 = arith.constant 0 : i32
    return %arg0, %arg1, %c0_i32 : i32, i32, i32
  }
}

</mosaic_0001>

<llo_original>
// kernel: tpu_custom_call.1
$region0: #{tpu_custom_call.1}
  #allocation0 [shape = 'u32[]', space=smem, size = 0x4, offset = 0x4, fixed_abs, tag = 'smem constant byte address 0x4 - core index']
  #allocation1 [shape = 'u32[144,128]{1,0:T(1,128)}', space=vmem, size = 0x12000, scoped, tag = 'internal scratch']
  %s0 = inlined_call_operand.hbm [shape: f32[2,2,128], index: 0, kind: input, shape index: {}]
  %s1 = inlined_call_operand.hbm [shape: f32[2,8,128], index: 1, kind: input, shape index: {}]
  %s2 = inlined_call_operand.hbm [shape: f32[2,8,128], index: 2, kind: output, shape index: {}]
  %s3 = sld [smem:[#allocation0]]
  $region49: #{tpu_custom_call.1} parent=0
    _
  %s5 = ssub.s32 1, %s3
  %s6 = scalar_select 0, %s5, %s3
  $region1: #{tpu_custom_call.1} parent=0
    #allocation2 [shape = 'u8[2048]{0}', space=vmem, size = 0x800, scoped, tag = 'input window, operand 0']
    #allocation3 [shape = 's32[2]{0}', space=sflag, size = 0x8, scoped, tag = 'scoped memory for tpu_custom_call.1']
    #allocation4 [shape = 's32[2]{0}', space=sflag, size = 0x8, scoped, tag = 'scoped memory for tpu_custom_call.1']
    #allocation5 [shape = 'u8[8192]{0}', space=vmem, size = 0x2000, scoped, tag = 'input window, operand 1']
    #allocation6 [shape = 's32[2]{0}', space=sflag, size = 0x8, scoped, tag = 'scoped memory for tpu_custom_call.1']
    #allocation7 [shape = 'u8[8192]{0}', space=vmem, size = 0x2000, scoped, tag = 'output window, operand 0']
    %7 = vsyncpa [#allocation3], 0
    %s8 = scalar_lea.sflag [#allocation3], 1
    %9 = vsyncpa %s8, 0
    %10 = vsyncpa [#allocation6], 0
    %s11 = scalar_lea.sflag [#allocation6], 1
    %12 = vsyncpa %s11, 0
    %13 = vsyncpa [#allocation4], 0
    %s14 = scalar_lea.sflag [#allocation4], 1
    %15 = vsyncpa %s14, 0
    loop: start=0, step=1, limit=4
    $region2: #{tpu_custom_call.1} parent=1 // loop_pre_header
      _
    $region3: #{tpu_custom_call.1} parent=1 // loop_header
      %s17 = sphi 0, %s21
      %p18 = scmp.ge.s32.totalorder %s17, 4
      %s24 = sphi 0, %s36
      %s25 = sphi 0, %s32
      %s26 = sphi 0, %s24
      %s27 = sphi 0, %s25
      %s28 = sphi 0, %s26
      %s29 = sphi 0, %s27
      %s39 = sphi 0, %s41
      %s42 = sphi 0, %s39
      %s43 = sphi 0, %s42
      %s59 = sphi 0, %s43
      %s67 = sphi 0, %s69
      %s70 = sphi 0, %s67
      %s71 = sphi 0, %s70
      %s87 = sphi 0, %s71
      %s95 = sphi 0, %s97
      %s98 = sphi 0, %s95
      %s99 = sphi 0, %s98
      %s115 = sphi 0, %s99
    $region4: #{tpu_custom_call.1} parent=1 // loop_header_branch
      %20 = sbr.rel (%p18) target = $region8
    $region5: #{tpu_custom_call.1} parent=1 // loop_body
      %s22 = ssub.s32 %s17, 1
      %s23 = ssub.s32 %s17, 2
      %s30 = sadd.s32 1, %s25
      %p31 = scmp.ge.s32.totalorder %s30, 1
      %s32 = scalar_select %p31, 0, %s30
      %s33 = sadd.s32 1, %s24
      %s34 = scalar_select %p31, %s33, %s24
      %p35 = scmp.ge.s32.totalorder %s34, 2
      %s36 = scalar_select %p35, 0, %s34
      %s37 = ssub.s32 %s24, %s36
      %p38 = scmp.eq.s32.totalorder %s37, 0
      %s40 = sadd.s32 %s39, 1
      %s41 = scalar_select %p38, %s39, %s40
      %p44 = pneg %p38
      %p45 = scmp.eq.s32.totalorder %s17, 1
      %p46 = por %p44, %p45
      %p47 = scmp.ne.s32.totalorder %s39, %s42
      %p48 = scmp.eq.s32.totalorder %s17, 0
      %p49 = por %p47, %p48
      %p50 = scmp.ne.s32.totalorder %s39, %s42
      %p51 = scmp.eq.s32.totalorder %s22, 1
      %p52 = por %p50, %p51
      %p53 = scmp.ne.s32.totalorder %s42, %s43
      %p54 = scmp.eq.s32.totalorder %s22, 0
      %p55 = por %p53, %p54
      %p56 = scmp.ne.s32.totalorder %s42, %s43
      %p57 = scmp.eq.s32.totalorder %s23, 1
      %p58 = por %p56, %p57
      %p60 = scmp.ne.s32.totalorder %s43, %s59
      %p61 = scmp.eq.s32.totalorder %s23, 0
      %p62 = por %p60, %p61
      %s63 = ssub.s32 %s24, %s36
      %s64 = ssub.s32 %s25, %s32
      %s65 = sor.u32 %s63, %s64
      %p66 = scmp.eq.s32.totalorder %s65, 0
      %s68 = sadd.s32 %s67, 1
      %s69 = scalar_select %p66, %s67, %s68
      %p72 = pneg %p66
      %p73 = scmp.eq.s32.totalorder %s17, 1
      %p74 = por %p72, %p73
      %p75 = scmp.ne.s32.totalorder %s67, %s70
      %p76 = scmp.eq.s32.totalorder %s17, 0
      %p77 = por %p75, %p76
      %p78 = scmp.ne.s32.totalorder %s67, %s70
      %p79 = scmp.eq.s32.totalorder %s22, 1
      %p80 = por %p78, %p79
      %p81 = scmp.ne.s32.totalorder %s70, %s71
      %p82 = scmp.eq.s32.totalorder %s22, 0
      %p83 = por %p81, %p82
      %p84 = scmp.ne.s32.totalorder %s70, %s71
      %p85 = scmp.eq.s32.totalorder %s23, 1
      %p86 = por %p84, %p85
      %p88 = scmp.ne.s32.totalorder %s71, %s87
      %p89 = scmp.eq.s32.totalorder %s23, 0
      %p90 = por %p88, %p89
      %s91 = ssub.s32 %s24, %s36
      %s92 = ssub.s32 %s25, %s32
      %s93 = sor.u32 %s91, %s92
      %p94 = scmp.eq.s32.totalorder %s93, 0
      %s96 = sadd.s32 %s95, 1
      %s97 = scalar_select %p94, %s95, %s96
      %p100 = pneg %p94
      %p101 = scmp.eq.s32.totalorder %s17, 1
      %p102 = por %p100, %p101
      %p103 = scmp.ne.s32.totalorder %s95, %s98
      %p104 = scmp.eq.s32.totalorder %s17, 0
      %p105 = por %p103, %p104
      %p106 = scmp.ne.s32.totalorder %s95, %s98
      %p107 = scmp.eq.s32.totalorder %s22, 1
      %p108 = por %p106, %p107
      %p109 = scmp.ne.s32.totalorder %s98, %s99
      %p110 = scmp.eq.s32.totalorder %s22, 0
      %p111 = por %p109, %p110
      %p112 = scmp.ne.s32.totalorder %s98, %s99
      %p113 = scmp.eq.s32.totalorder %s23, 1
      %p114 = por %p112, %p113
      %p116 = scmp.ne.s32.totalorder %s99, %s115
      %p117 = scmp.eq.s32.totalorder %s23, 0
      %p118 = por %p116, %p117
      %p119 = scmp.le.s32.totalorder 1, %s17
      %p120 = scmp.lt.s32.totalorder %s17, 3
      %p121 = pnand %p119, %p120
      %p122 = pneg %p121
      // Predicated region
      $region9: #{tpu_custom_call.1} parent=5 // pred_check
        _
      $region10: #{tpu_custom_call.1} parent=5 // pred_check_branch
        %124 = sbr.rel (%p121) target = $region12
      $region11: #{tpu_custom_call.1} parent=5 // pred_region
        %s125 = ssub.s32 %s17, 1
      $region12: #{tpu_custom_call.1} parent=5 // pred_fallthru
        _
      %p126 = scmp.lt.s32.totalorder %s17, 2
      // Predicated region
      $region13: #{tpu_custom_call.1} parent=5 // pred_check
        %p127 = pneg %p126
      $region14: #{tpu_custom_call.1} parent=5 // pred_check_branch
        %129 = sbr.rel (%p127) target = $region16
      $region15: #{tpu_custom_call.1} parent=5 // pred_region
        // Predicated region
        $region17: #{tpu_custom_call.1} parent=15 // pred_check
          %p130 = pneg %p49
        $region18: #{tpu_custom_call.1} parent=15 // pred_check_branch
          %132 = sbr.rel (%p130) target = $region20
        $region19: #{tpu_custom_call.1} parent=15 // pred_region
          %s133 = sand.u32 %s39, 1
          %s134 = scalar_lea.sflag [#allocation3], %s133
          %s135 = sand.u32 %s39, 1
          %s136 = smul.addr %s135, 2
          %s137 = scalar_lea.vmem [#allocation2], %s136
          %s139 = ssub.s32 32, 32
          %140 = vsyncadd %s134, %s139
          %s141 = smul.addr %s24, 32
          %s142 = scalar_lea.hbm %s0, %s141
          %s144 = sshll.u32 %s137, 4
          %s145 = int_to_ptr.vmem [resolvable:$true] %s144
          %147 = dma.hbm_to_vmem [thread:$0]  %s142, 32, %s145, %s134
        $region20: #{tpu_custom_call.1} parent=15 // pred_fallthru
          _
        // Predicated region
        $region21: #{tpu_custom_call.1} parent=15 // pred_check
          %p148 = pneg %p77
        $region22: #{tpu_custom_call.1} parent=15 // pred_check_branch
          %150 = sbr.rel (%p148) target = $region24
        $region23: #{tpu_custom_call.1} parent=15 // pred_region
          %s151 = sand.u32 %s67, 1
          %s152 = scalar_lea.sflag [#allocation6], %s151
          %s153 = sand.u32 %s67, 1
          %s154 = smul.addr %s153, 8
          %s155 = scalar_lea.vmem [#allocation5], %s154
          %s157 = ssub.s32 128, 128
          %158 = vsyncadd %s152, %s157
          %s159 = sadd.s32 %s25, %s24
          %s160 = smul.addr %s159, 128
          %s161 = scalar_lea.hbm %s1, %s160
          %s163 = sshll.u32 %s155, 4
          %s164 = int_to_ptr.vmem [resolvable:$true] %s163
          %166 = dma.hbm_to_vmem [thread:$0]  %s161, 128, %s164, %s152
        $region24: #{tpu_custom_call.1} parent=15 // pred_fallthru
          _
      $region16: #{tpu_custom_call.1} parent=5 // pred_fallthru
        _
      %p167 = scmp.le.s32.totalorder 1, %s17
      %p168 = scmp.lt.s32.totalorder %s17, 3
      %p169 = pnand %p167, %p168
      %p170 = pneg %p169
      // Predicated region
      $region25: #{tpu_custom_call.1} parent=5 // pred_check
        _
      $region26: #{tpu_custom_call.1} parent=5 // pred_check_branch
        %172 = sbr.rel (%p169) target = $region28
      $region27: #{tpu_custom_call.1} parent=5 // pred_region
        %s173 = ssub.s32 %s17, 1
        %s174 = sand.u32 %s42, 1
        %s175 = scalar_lea.sflag [#allocation3], %s174
        %s176 = sand.u32 %s42, 1
        %s177 = smul.addr %s176, 2
        %s178 = scalar_lea.vmem [#allocation2], %s177
        // Predicated region
        $region29: #{tpu_custom_call.1} parent=27 // pred_check
          %p179 = pneg %p55
        $region30: #{tpu_custom_call.1} parent=27 // pred_check_branch
          %181 = sbr.rel (%p179) target = $region32
        $region31: #{tpu_custom_call.1} parent=27 // pred_region
          %182 = dma.done %s175, 32
        $region32: #{tpu_custom_call.1} parent=27 // pred_fallthru
          _
        %s183 = sand.u32 %s70, 1
        %s184 = scalar_lea.sflag [#allocation6], %s183
        %s185 = sand.u32 %s70, 1
        %s186 = smul.addr %s185, 8
        %s187 = scalar_lea.vmem [#allocation5], %s186
        // Predicated region
        $region33: #{tpu_custom_call.1} parent=27 // pred_check
          %p188 = pneg %p83
        $region34: #{tpu_custom_call.1} parent=27 // pred_check_branch
          %190 = sbr.rel (%p188) target = $region36
        $region35: #{tpu_custom_call.1} parent=27 // pred_region
          %191 = dma.done %s184, 128
        $region36: #{tpu_custom_call.1} parent=27 // pred_fallthru
          _
        %s192 = sand.u32 %s42, 1
        %s193 = scalar_lea.sflag [#allocation3], %s192
        %s194 = sand.u32 %s42, 1
        %s195 = smul.addr %s194, 2
        %s196 = scalar_lea.vmem [#allocation2], %s195
        %p197 = pneg %p55
        %p198 = pneg %p52
        %s199 = sand.u32 %s70, 1
        %s200 = scalar_lea.sflag [#allocation6], %s199
        %s201 = sand.u32 %s70, 1
        %s202 = smul.addr %s201, 8
        %s203 = scalar_lea.vmem [#allocation5], %s202
        %p204 = pneg %p83
        %p205 = pneg %p80
        %p206 = pneg %p111
        %p207 = pneg %p108
        %s208 = sand.u32 %s98, 1
        %s209 = scalar_lea.sflag [#allocation4], %s208
        %s210 = sand.u32 %s98, 1
        %s211 = smul.addr %s210, 8
        %s212 = scalar_lea.vmem [#allocation7], %s211
        %v213 = vld [vmem:[%s187] sm:$0xff]
        %214 = vadd.xlane.f32.xlu0 %v213
        %v215 = vpop.xlane.xlu0 %214
        %v216 = vmul.f32 %v215, 0.0078125
        %v217 = vmul.f32 %v213, %v213
        %218 = vadd.xlane.f32.xlu0 %v217
        %v219 = vpop.xlane.xlu0 %218
        %v220 = vmul.f32 %v219, 0.0078125
        %v221 = vmul.f32 %v216, %v216
        %v222 = vsub.f32 %v220, %v221
        %v223 = vmax.f32 %v222, 0.0
        %v224 = vadd.f32 %v223, 1e-05
        %v225 = vrsqrt.pop %v224
        %v226 = vld [vmem:[%s178] sm:$0x1]
        %v227 = vld [vmem:[%s178 + $0x1] sm:$0x1]
        %v228 = vsub.f32 %v213, %v216
        %v229 = vlaneseq
        %v230 = vshrl.u32 %v229, 7
        %v231 = vsub.s32 0, %v230
        %v232 = vrot.slane %v226, %v231
        %v233 = vmul.f32 %v225, %v232
        %v234 = vmul.f32 %v228, %v233
        %v235 = vlaneseq
        %v236 = vshrl.u32 %v235, 7
        %v237 = vsub.s32 0, %v236
        %v238 = vrot.slane %v227, %v237
        %v239 = vadd.f32 %v234, %v238
        %240 = vst [vmem:[%s212] sm:$0xff] %v239
        %s241 = sand.u32 %s98, 1
        %s242 = scalar_lea.sflag [#allocation4], %s241
        %s243 = sand.u32 %s98, 1
        %s244 = smul.addr %s243, 8
        %s245 = scalar_lea.vmem [#allocation7], %s244
        // Predicated region
        $region37: #{tpu_custom_call.1} parent=27 // pred_check
          %p246 = pneg %p108
        $region38: #{tpu_custom_call.1} parent=27 // pred_check_branch
          %248 = sbr.rel (%p246) target = $region40
        $region39: #{tpu_custom_call.1} parent=27 // pred_region
          %s250 = ssub.s32 128, 128
          %251 = vsyncadd %s242, %s250
          %s252 = sadd.s32 %s27, %s26
          %s253 = smul.addr %s252, 128
          %s254 = scalar_lea.hbm %s2, %s253
          %s256 = sshll.u32 %s245, 4
          %s257 = int_to_ptr.vmem [resolvable:$true] %s256
          %259 = dma.vmem_to_hbm [thread:$0]  %s257, 128, %s254, %s242
        $region40: #{tpu_custom_call.1} parent=27 // pred_fallthru
          _
      $region28: #{tpu_custom_call.1} parent=5 // pred_fallthru
        _
      %p260 = scmp.le.s32.totalorder 2, %s17
      // Predicated region
      $region41: #{tpu_custom_call.1} parent=5 // pred_check
        %p261 = pneg %p260
      $region42: #{tpu_custom_call.1} parent=5 // pred_check_branch
        %263 = sbr.rel (%p261) target = $region44
      $region43: #{tpu_custom_call.1} parent=5 // pred_region
        %s264 = ssub.s32 %s17, 2
        // Predicated region
        $region45: #{tpu_custom_call.1} parent=43 // pred_check
          %p265 = pneg %p114
        $region46: #{tpu_custom_call.1} parent=43 // pred_check_branch
          %267 = sbr.rel (%p265) target = $region48
        $region47: #{tpu_custom_call.1} parent=43 // pred_region
          %s268 = sand.u32 %s99, 1
          %s269 = scalar_lea.sflag [#allocation4], %s268
          %s270 = sand.u32 %s99, 1
          %s271 = smul.addr %s270, 8
          %s272 = scalar_lea.vmem [#allocation7], %s271
          %273 = dma.done %s269, 128
        $region48: #{tpu_custom_call.1} parent=43 // pred_fallthru
          _
      $region44: #{tpu_custom_call.1} parent=5 // pred_fallthru
        _
    $region6: #{tpu_custom_call.1} parent=1 // loop_footer
      %s21 = sadd.s32 1, %s17
    $region7: #{tpu_custom_call.1} parent=1 // loop_footer_branch
      %16 = sbr.rel target = $region3
    $region8: #{tpu_custom_call.1} parent=1 // loop_exit
      _
    %274 = vsyncpa [#allocation3], 1
    %s275 = scalar_lea.sflag [#allocation3], 1
    %276 = vsyncpa %s275, 1
    %277 = vsyncpa [#allocation6], 1
    %s278 = scalar_lea.sflag [#allocation6], 1
    %279 = vsyncpa %s278, 1
    %280 = vsyncpa [#allocation4], 1
    %s281 = scalar_lea.sflag [#allocation4], 1
    %282 = vsyncpa %s281, 1

</llo_original>
